<compile_context>
chip_gen: v7x
topology: tpu7x:2x2x1
jax: 0.10.0
libtpu: 0.0.40
codegen_flags: <defaults>
</compile_context>

<pallas_src>
import math

import jax
import jax.numpy as jnp
from jax.experimental import pallas as pl
from jax.experimental.pallas import tpu as pltpu

BN_EPS = 1e-5  # nn.BatchNorm1d default eps


def _bn_relu(h, g, b):
    """Training-mode BatchNorm1d over the position axis (rows) + ReLU."""
    m = jnp.mean(h, axis=0, keepdims=True)
    d = h - m
    v = jnp.mean(d * d, axis=0, keepdims=True)
    return jnp.maximum(d * jax.lax.rsqrt(v + BN_EPS) * g + b, 0.0)


def _pool_stride2(h):
    """MaxPool1d(kernel_size=1, stride=2) == keep every 2nd position (row)."""
    rows = [h[i:i + 1, :] for i in range(0, h.shape[0], 2)]
    return rows[0] if len(rows) == 1 else jnp.concatenate(rows, axis=0)


def actor_kernel(x_ref, cp_ref, w3t_ref, fw1t_ref, fw2t_ref, fw3t_ref, fcb_ref,
                 mu_ref, logstd_ref):
    # Packed conv-path parameters: one (8, 128) f32 tile, one row per vector.
    w1 = cp_ref[0:1, 0:25]
    b1 = cp_ref[1:2, 0:25]
    g1 = cp_ref[2:3, 0:25]
    be1 = cp_ref[3:4, 0:25]
    b3 = cp_ref[4:5, 0:50]
    g3 = cp_ref[5:6, 0:50]
    be3 = cp_ref[6:7, 0:50]

    x = x_ref[...]                                   # (L, 1) position column

    # layer1: Conv1d(1->25, k=1) == outer product, row-major (L, 25)
    h = x * w1 + b1
    h = _bn_relu(h, g1, be1)

    # layer2: MaxPool1d(k=1, stride=2) -> static stride-2 row select
    h = _pool_stride2(h)                             # (L2, 25)

    # layer3: Conv1d(25->50, k=1) + BN + ReLU
    h = jnp.dot(h, w3t_ref[...], preferred_element_type=jnp.float32) + b3
    h = _bn_relu(h, g3, be3)                         # (L2, 50)

    # layer4: MaxPool1d(k=1, stride=2)
    h = _pool_stride2(h)                             # (L3, 50), L3 == 1
    mu_ref[...] = h                                  # lane-dense (1, 50) store

    # fc: 50 -> 1024 -> ReLU -> 128 -> ReLU -> action_size (row vectors)
    a = logstd_ref.shape[1]
    f = jnp.dot(h.astype(jnp.bfloat16), fw1t_ref[...],
                preferred_element_type=jnp.float32) + fcb_ref[0:1, 0:1024]
    f = jnp.maximum(f, 0.0)
    f = jnp.dot(f.astype(jnp.bfloat16), fw2t_ref[...],
                preferred_element_type=jnp.float32) + fcb_ref[0:1, 1024:1152]
    f = jnp.maximum(f, 0.0)
    logstd_ref[...] = (jnp.dot(f, fw3t_ref[...], preferred_element_type=jnp.float32)
                       + fcb_ref[0:1, 1152:1152 + a])


def _pad_row(v, n=128):
    v = jnp.asarray(v, jnp.float32).reshape(-1)
    return jnp.pad(v, (0, n - v.shape[0]))


def prepare_params(params):
    """One-time packing/transposing/casting of the Actor parameters."""
    conv = jnp.stack([
        _pad_row(params["w1"]), _pad_row(params["b1"]),
        _pad_row(params["g1"]), _pad_row(params["be1"]),
        _pad_row(params["b3"]), _pad_row(params["g3"]),
        _pad_row(params["be3"]), jnp.zeros((128,), jnp.float32),
    ])                                                           # (8, 128)
    fc_bias = jnp.concatenate([
        jnp.asarray(params["fb1"], jnp.float32).reshape(-1),     # 1024
        jnp.asarray(params["fb2"], jnp.float32).reshape(-1),     # 128
        _pad_row(params["fb3"]),                                 # 128 (padded)
    ]).reshape(1, 1280)
    return dict(
        conv=conv,
        w3t=jnp.asarray(params["w3"], jnp.float32).T,            # (25, 50)
        fw1t=jnp.asarray(params["fw1"]).T.astype(jnp.bfloat16),  # (50, 1024)
        fw2t=jnp.asarray(params["fw2"]).T.astype(jnp.bfloat16),  # (1024, 128)
        fw3t=jnp.asarray(params["fw3"], jnp.float32).T,          # (128, A)
        fc_bias=fc_bias,
    )


def actor_forward(state, packed, action_size):
    """state: (1, L) float32 — forward() wraps it into a (1, 1, L) conv input."""
    L = state.shape[-1]
    L2 = (L - 1) // 2 + 1
    L3 = (L2 - 1) // 2 + 1
    assert 50 * L3 == 50, "Actor.fc requires the flattened conv feature to be 50"

    x_col = state.astype(jnp.float32).reshape(L, 1)

    inputs = (x_col, packed["conv"], packed["w3t"], packed["fw1t"],
              packed["fw2t"], packed["fw3t"], packed["fc_bias"])

    flops = 2 * (L2 * 25 * 50 + 50 * 1024 + 1024 * 128 + 128 * action_size)
    bytes_acc = sum(int(a.size) * a.dtype.itemsize for a in inputs)
    bytes_acc += (50 * L3 + action_size) * 4

    vmem = pl.BlockSpec(memory_space=pltpu.MemorySpace.VMEM)
    mu_row, logstd = pl.pallas_call(
        actor_kernel,
        out_shape=(jax.ShapeDtypeStruct((L3, 50), jnp.float32),
                   jax.ShapeDtypeStruct((1, action_size), jnp.float32)),
        in_specs=[vmem] * len(inputs),
        out_specs=(vmem, vmem),
        cost_estimate=pl.CostEstimate(flops=flops, transcendentals=75,
                                      bytes_accessed=bytes_acc),
    )(*inputs)

    mu = mu_row.T.reshape(1, 50, L3)                # torch: (N=1, C=50, L=1)
    log_std = logstd.reshape(1, action_size)        # torch: (1, action_size)
    return mu, log_std


def actor_forward_ref(state, params, action_size):
    """Pure-JAX f32 reference (torch (C, L) orientation), for a sanity check."""
    def bn(h, g, b):
        m = jnp.mean(h, axis=1, keepdims=True)
        v = jnp.mean((h - m) ** 2, axis=1, keepdims=True)
        return (h - m) * jax.lax.rsqrt(v + BN_EPS) * g[:, None] + b[:, None]

    x = state.astype(jnp.float32)                           # (1, L)
    h = params["w1"][:, None] * x + params["b1"][:, None]   # (25, L)
    h = jnp.maximum(bn(h, params["g1"], params["be1"]), 0.0)
    h = h[:, ::2]
    h = params["w3"] @ h + params["b3"][:, None]            # (50, L2)
    h = jnp.maximum(bn(h, params["g3"], params["be3"]), 0.0)
    h = h[:, ::2]                                           # (50, L3)
    mu = h[None]                                            # (1, 50, L3)
    f = h.reshape(-1)                                       # (50,)  (L3 == 1)
    f = jnp.maximum(params["fw1"] @ f + params["fb1"], 0.0)
    f = jnp.maximum(params["fw2"] @ f + params["fb2"], 0.0)
    out = params["fw3"] @ f + params["fb3"]
    return mu, out.reshape(1, action_size)


def init_params(key, action_size):
    """Deterministic synthetic parameters with PyTorch-default-like scales."""
    ks = jax.random.split(key, 10)

    def lin(kw, kb, out_f, in_f):
        lim = 1.0 / math.sqrt(in_f)
        w = jax.random.uniform(kw, (out_f, in_f), jnp.float32, -lim, lim)
        b = jax.random.uniform(kb, (out_f,), jnp.float32, -lim, lim)
        return w, b

    w1, b1 = lin(ks[0], ks[1], 25, 1)               # Conv1d(1,25,k=1)
    w3, b3 = lin(ks[2], ks[3], 50, 25)              # Conv1d(25,50,k=1)
    fw1, fb1 = lin(ks[4], ks[5], 1024, 50)          # Linear(50,1024)
    fw2, fb2 = lin(ks[6], ks[7], 128, 1024)         # Linear(1024,128)
    fw3, fb3 = lin(ks[8], ks[9], action_size, 128)  # Linear(128, action_size)

    return dict(
        w1=w1.reshape(25), b1=b1,
        g1=jnp.ones((25,), jnp.float32), be1=jnp.zeros((25,), jnp.float32),
        w3=w3, b3=b3,
        g3=jnp.ones((50,), jnp.float32), be3=jnp.zeros((50,), jnp.float32),
        fw1=fw1, fb1=fb1, fw2=fw2, fb2=fb2, fw3=fw3, fb3=fb3,
    )


# TODO(synk): fc1/fc2/mu/log_std_linear layers and the sample() method
# (torch.distributions.Normal.rsample) are not part of forward(); omitted.

if __name__ == "__main__":
    key = jax.random.PRNGKey(0)
    k_state, k_params = jax.random.split(key)

    action_size = 6
    L = 4  # after two stride-2 pools L -> 1, as Actor.fc requires
    state = jax.random.uniform(k_state, (1, L), jnp.float32, -1.0, 1.0)
    params = init_params(k_params, action_size)
    packed = prepare_params(params)

    mu, log_std = actor_forward(state, packed, action_size)
    jax.block_until_ready((mu, log_std))

    assert mu.shape == (1, 50, 1) and mu.dtype == jnp.float32
    assert log_std.shape == (1, action_size) and log_std.dtype == jnp.float32

    mu_ref, ls_ref = actor_forward_ref(state, params, action_size)
    assert jnp.allclose(mu, mu_ref, atol=1e-2, rtol=1e-2)
    assert jnp.allclose(log_std, ls_ref, atol=1e-2, rtol=1e-2)

    print("KERNEL_OK")
</pallas_src>

<mosaic_0001>
module attributes {stable_mosaic.version = 11 : i64} {
  func.func @actor_kernel(%arg0: memref<4x1xf32, #tpu.memory_space<vmem>>, %arg1: memref<8x128xf32, #tpu.memory_space<vmem>>, %arg2: memref<25x50xf32, #tpu.memory_space<vmem>>, %arg3: memref<50x1024xbf16, #tpu.memory_space<vmem>>, %arg4: memref<1024x128xbf16, #tpu.memory_space<vmem>>, %arg5: memref<128x6xf32, #tpu.memory_space<vmem>>, %arg6: memref<1x1280xf32, #tpu.memory_space<vmem>>, %arg7: memref<1x50xf32, #tpu.memory_space<vmem>>, %arg8: memref<1x6xf32, #tpu.memory_space<vmem>>) attributes {dimension_semantics = [], scalar_prefetch = 0 : i64, scratch_operands = 0 : i64, tpu.core_type = #tpu.core_type<tc>} {
    %c0 = arith.constant 0 : index
    %c0_0 = arith.constant 0 : index
    %0 = vector.load %arg1[%c0, %c0_0] : memref<8x128xf32, #tpu.memory_space<vmem>>, vector<1x25xf32>
    %c1 = arith.constant 1 : index
    %c0_1 = arith.constant 0 : index
    %1 = vector.load %arg1[%c1, %c0_1] : memref<8x128xf32, #tpu.memory_space<vmem>>, vector<1x25xf32>
    %c2 = arith.constant 2 : index
    %c0_2 = arith.constant 0 : index
    %2 = vector.load %arg1[%c2, %c0_2] : memref<8x128xf32, #tpu.memory_space<vmem>>, vector<1x25xf32>
    %c3 = arith.constant 3 : index
    %c0_3 = arith.constant 0 : index
    %3 = vector.load %arg1[%c3, %c0_3] : memref<8x128xf32, #tpu.memory_space<vmem>>, vector<1x25xf32>
    %c4 = arith.constant 4 : index
    %c0_4 = arith.constant 0 : index
    %4 = vector.load %arg1[%c4, %c0_4] : memref<8x128xf32, #tpu.memory_space<vmem>>, vector<1x50xf32>
    %c5 = arith.constant 5 : index
    %c0_5 = arith.constant 0 : index
    %5 = vector.load %arg1[%c5, %c0_5] : memref<8x128xf32, #tpu.memory_space<vmem>>, vector<1x50xf32>
    %c6 = arith.constant 6 : index
    %c0_6 = arith.constant 0 : index
    %6 = vector.load %arg1[%c6, %c0_6] : memref<8x128xf32, #tpu.memory_space<vmem>>, vector<1x50xf32>
    %c0_7 = arith.constant 0 : index
    %c0_8 = arith.constant 0 : index
    %7 = vector.load %arg0[%c0_7, %c0_8] : memref<4x1xf32, #tpu.memory_space<vmem>>, vector<4x1xf32>
    %8 = vector.broadcast %7 : vector<4x1xf32> to vector<4x25xf32>
    %9 = vector.broadcast %0 : vector<1x25xf32> to vector<4x25xf32>
    %10 = arith.mulf %8, %9 : vector<4x25xf32>
    %11 = vector.broadcast %1 : vector<1x25xf32> to vector<4x25xf32>
    %12 = arith.addf %10, %11 : vector<4x25xf32>
    %cst = arith.constant dense<0.000000e+00> : vector<25xf32>
    %13 = vector.multi_reduction <add>, %12, %cst [0] : vector<4x25xf32> to vector<25xf32>
    %14 = vector.shape_cast %13 : vector<25xf32> to vector<1x25xf32>
    %cst_9 = arith.constant 4.000000e+00 : f32
    %15 = vector.broadcast %cst_9 : f32 to vector<1x25xf32>
    %16 = arith.divf %14, %15 : vector<1x25xf32>
    %17 = vector.broadcast %16 : vector<1x25xf32> to vector<4x25xf32>
    %18 = arith.subf %12, %17 : vector<4x25xf32>
    %19 = arith.mulf %18, %18 : vector<4x25xf32>
    %cst_10 = arith.constant dense<0.000000e+00> : vector<25xf32>
    %20 = vector.multi_reduction <add>, %19, %cst_10 [0] : vector<4x25xf32> to vector<25xf32>
    %21 = vector.shape_cast %20 : vector<25xf32> to vector<1x25xf32>
    %cst_11 = arith.constant 4.000000e+00 : f32
    %22 = vector.broadcast %cst_11 : f32 to vector<1x25xf32>
    %23 = arith.divf %21, %22 : vector<1x25xf32>
    %cst_12 = arith.constant 9.99999974E-6 : f32
    %24 = vector.broadcast %cst_12 : f32 to vector<1x25xf32>
    %25 = arith.addf %23, %24 : vector<1x25xf32>
    %26 = math.rsqrt %25 : vector<1x25xf32>
    %27 = vector.broadcast %26 : vector<1x25xf32> to vector<4x25xf32>
    %28 = arith.mulf %18, %27 : vector<4x25xf32>
    %29 = vector.broadcast %2 : vector<1x25xf32> to vector<4x25xf32>
    %30 = arith.mulf %28, %29 : vector<4x25xf32>
    %31 = vector.broadcast %3 : vector<1x25xf32> to vector<4x25xf32>
    %32 = arith.addf %30, %31 : vector<4x25xf32>
    %cst_13 = arith.constant 0.000000e+00 : f32
    %33 = vector.broadcast %cst_13 : f32 to vector<4x25xf32>
    %34 = arith.maximumf %32, %33 : vector<4x25xf32>
    %35 = vector.extract_strided_slice %34 {offsets = [0, 0], sizes = [1, 25], strides = [1, 1]} : vector<4x25xf32> to vector<1x25xf32>
    %36 = vector.extract_strided_slice %34 {offsets = [2, 0], sizes = [1, 25], strides = [1, 1]} : vector<4x25xf32> to vector<1x25xf32>
    %37 = tpu.concatenate %35, %36 in 0 : vector<1x25xf32>, vector<1x25xf32> -> vector<2x25xf32>
    %c0_14 = arith.constant 0 : index
    %c0_15 = arith.constant 0 : index
    %38 = vector.load %arg2[%c0_14, %c0_15] : memref<25x50xf32, #tpu.memory_space<vmem>>, vector<25x50xf32>
    %cst_16 = arith.constant dense<0.000000e+00> : vector<2x50xf32>
    %39 = tpu.matmul %37, %38, %cst_16 {dimension_numbers = #tpu.dot_dimension_numbers<[1], [0], [0], [1], [0, 0, 1, 1], [], []>} : vector<2x25xf32>, vector<25x50xf32>, vector<2x50xf32> -> vector<2x50xf32>
    %40 = vector.broadcast %4 : vector<1x50xf32> to vector<2x50xf32>
    %41 = arith.addf %39, %40 : vector<2x50xf32>
    %cst_17 = arith.constant dense<0.000000e+00> : vector<50xf32>
    %42 = vector.multi_reduction <add>, %41, %cst_17 [0] : vector<2x50xf32> to vector<50xf32>
    %43 = vector.shape_cast %42 : vector<50xf32> to vector<1x50xf32>
    %cst_18 = arith.constant 2.000000e+00 : f32
    %44 = vector.broadcast %cst_18 : f32 to vector<1x50xf32>
    %45 = arith.divf %43, %44 : vector<1x50xf32>
    %46 = vector.broadcast %45 : vector<1x50xf32> to vector<2x50xf32>
    %47 = arith.subf %41, %46 : vector<2x50xf32>
    %48 = arith.mulf %47, %47 : vector<2x50xf32>
    %cst_19 = arith.constant dense<0.000000e+00> : vector<50xf32>
    %49 = vector.multi_reduction <add>, %48, %cst_19 [0] : vector<2x50xf32> to vector<50xf32>
    %50 = vector.shape_cast %49 : vector<50xf32> to vector<1x50xf32>
    %cst_20 = arith.constant 2.000000e+00 : f32
    %51 = vector.broadcast %cst_20 : f32 to vector<1x50xf32>
    %52 = arith.divf %50, %51 : vector<1x50xf32>
    %cst_21 = arith.constant 9.99999974E-6 : f32
    %53 = vector.broadcast %cst_21 : f32 to vector<1x50xf32>
    %54 = arith.addf %52, %53 : vector<1x50xf32>
    %55 = math.rsqrt %54 : vector<1x50xf32>
    %56 = vector.broadcast %55 : vector<1x50xf32> to vector<2x50xf32>
    %57 = arith.mulf %47, %56 : vector<2x50xf32>
    %58 = vector.broadcast %5 : vector<1x50xf32> to vector<2x50xf32>
    %59 = arith.mulf %57, %58 : vector<2x50xf32>
    %60 = vector.broadcast %6 : vector<1x50xf32> to vector<2x50xf32>
    %61 = arith.addf %59, %60 : vector<2x50xf32>
    %cst_22 = arith.constant 0.000000e+00 : f32
    %62 = vector.broadcast %cst_22 : f32 to vector<2x50xf32>
    %63 = arith.maximumf %61, %62 : vector<2x50xf32>
    %64 = vector.extract_strided_slice %63 {offsets = [0, 0], sizes = [1, 50], strides = [1, 1]} : vector<2x50xf32> to vector<1x50xf32>
    %c0_23 = arith.constant 0 : index
    %c0_24 = arith.constant 0 : index
    %65 = vector.load %arg7[%c0_23, %c0_24] : memref<1x50xf32, #tpu.memory_space<vmem>>, vector<1x50xf32>
    tpu.vector_store %arg7[%c0_23, %c0_24], %64 {strides = array<i32>} : memref<1x50xf32, #tpu.memory_space<vmem>>, vector<1x50xf32>,
    %66 = arith.truncf %64 : vector<1x50xf32> to vector<1x50xbf16>
    %c0_25 = arith.constant 0 : index
    %c0_26 = arith.constant 0 : index
    %67 = vector.load %arg3[%c0_25, %c0_26] : memref<50x1024xbf16, #tpu.memory_space<vmem>>, vector<50x1024xbf16>
    %cst_27 = arith.constant dense<0.000000e+00> : vector<1x1024xf32>
    %68 = tpu.matmul %66, %67, %cst_27 {dimension_numbers = #tpu.dot_dimension_numbers<[1], [0], [0], [1], [0, 0, 1, 1], [], []>} : vector<1x50xbf16>, vector<50x1024xbf16>, vector<1x1024xf32> -> vector<1x1024xf32>
    %c0_28 = arith.constant 0 : index
    %c0_29 = arith.constant 0 : index
    %69 = vector.load %arg6[%c0_28, %c0_29] : memref<1x1280xf32, #tpu.memory_space<vmem>>, vector<1x1024xf32>
    %70 = arith.addf %68, %69 : vector<1x1024xf32>
    %cst_30 = arith.constant 0.000000e+00 : f32
    %71 = vector.broadcast %cst_30 : f32 to vector<1x1024xf32>
    %72 = arith.maximumf %70, %71 : vector<1x1024xf32>
    %73 = arith.truncf %72 : vector<1x1024xf32> to vector<1x1024xbf16>
    %c0_31 = arith.constant 0 : index
    %c0_32 = arith.constant 0 : index
    %74 = vector.load %arg4[%c0_31, %c0_32] : memref<1024x128xbf16, #tpu.memory_space<vmem>>, vector<1024x128xbf16>
    %cst_33 = arith.constant dense<0.000000e+00> : vector<1x128xf32>
    %75 = tpu.matmul %73, %74, %cst_33 {dimension_numbers = #tpu.dot_dimension_numbers<[1], [0], [0], [1], [0, 0, 1, 1], [], []>} : vector<1x1024xbf16>, vector<1024x128xbf16>, vector<1x128xf32> -> vector<1x128xf32>
    %c0_34 = arith.constant 0 : index
    %c1024 = arith.constant 1024 : index
    %76 = vector.load %arg6[%c0_34, %c1024] : memref<1x1280xf32, #tpu.memory_space<vmem>>, vector<1x128xf32>
    %77 = arith.addf %75, %76 : vector<1x128xf32>
    %cst_35 = arith.constant 0.000000e+00 : f32
    %78 = vector.broadcast %cst_35 : f32 to vector<1x128xf32>
    %79 = arith.maximumf %77, %78 : vector<1x128xf32>
    %c0_36 = arith.constant 0 : index
    %c0_37 = arith.constant 0 : index
    %80 = vector.load %arg5[%c0_36, %c0_37] : memref<128x6xf32, #tpu.memory_space<vmem>>, vector<128x6xf32>
    %cst_38 = arith.constant dense<0.000000e+00> : vector<1x6xf32>
    %81 = tpu.matmul %79, %80, %cst_38 {dimension_numbers = #tpu.dot_dimension_numbers<[1], [0], [0], [1], [0, 0, 1, 1], [], []>} : vector<1x128xf32>, vector<128x6xf32>, vector<1x6xf32> -> vector<1x6xf32>
    %c0_39 = arith.constant 0 : index
    %c1152 = arith.constant 1152 : index
    %82 = vector.load %arg6[%c0_39, %c1152] : memref<1x1280xf32, #tpu.memory_space<vmem>>, vector<1x6xf32>
    %83 = arith.addf %81, %82 : vector<1x6xf32>
    %c0_40 = arith.constant 0 : index
    %c0_41 = arith.constant 0 : index
    %84 = vector.load %arg8[%c0_40, %c0_41] : memref<1x6xf32, #tpu.memory_space<vmem>>, vector<1x6xf32>
    tpu.vector_store %arg8[%c0_40, %c0_41], %83 {strides = array<i32>} : memref<1x6xf32, #tpu.memory_space<vmem>>, vector<1x6xf32>,
    return
  }
}

</mosaic_0001>

<llo_original>
// kernel: tpu_custom_call.1
$region0: #{tpu_custom_call.1}
  #allocation0 [shape = 'u32[]', space=smem, size = 0x4, offset = 0x4, fixed_abs, tag = 'smem constant byte address 0x4 - core index']
  #allocation1 [shape = 'u32[144,128]{1,0:T(1,128)}', space=vmem, size = 0x12000, scoped, tag = 'internal scratch']
  %s0 = inlined_call_operand.vmem [shape: f32[4,1], index: 0, kind: input, shape index: {}]
  %s1 = inlined_call_operand.vmem [shape: f32[8,128], index: 1, kind: input, shape index: {}]
  %s2 = inlined_call_operand.vmem [shape: f32[25,50], index: 2, kind: input, shape index: {}]
  %s3 = inlined_call_operand.hbm [shape: bf16[50,1024], index: 3, kind: input, shape index: {}]
  %s4 = inlined_call_operand.hbm [shape: bf16[1024,128], index: 4, kind: input, shape index: {}]
  %s5 = inlined_call_operand.vmem [shape: f32[128,6], index: 5, kind: input, shape index: {}]
  %s6 = inlined_call_operand.vmem [shape: f32[1,1280], index: 6, kind: input, shape index: {}]
  %s7 = inlined_call_operand.hbm [shape: f32[1,50], index: 7, kind: output, shape index: {0}]
  %s8 = inlined_call_operand.hbm [shape: f32[1,6], index: 8, kind: output, shape index: {1}]
  %9 = xla_tuple %s7, %s8
  %s10 = sld [smem:[#allocation0]]
  $region54: #{tpu_custom_call.1} parent=0
    _
  %s12 = ssub.s32 1, %s10
  %s13 = scalar_select 0, %s12, %s10
  $region1: #{tpu_custom_call.1} parent=0
    #allocation2 [shape = 'u8[114688]{0}', space=vmem, size = 0x1c000, scoped, tag = 'input window, operand 3, single buffered']
    #allocation3 [shape = 's32[1]{0}', space=sflag, size = 0x4, scoped, tag = 'scoped memory for tpu_custom_call.1']
    #allocation4 [shape = 's32[1]{0}', space=sflag, size = 0x4, scoped, tag = 'scoped memory for tpu_custom_call.1']
    #allocation5 [shape = 'u8[262144]{0}', space=vmem, size = 0x40000, scoped, tag = 'input window, operand 4, single buffered']
    #allocation6 [shape = 's32[1]{0}', space=sflag, size = 0x4, scoped, tag = 'scoped memory for tpu_custom_call.1']
    #allocation7 [shape = 'u8[512]{0}', space=vmem, size = 0x400, scoped, tag = 'output window, operand 0, single buffered']
    #allocation8 [shape = 'u8[512]{0}', space=vmem, size = 0x400, scoped, tag = 'output window, operand 1, single buffered']
    #allocation9 [shape = 's32[1]{0}', space=sflag, size = 0x4, scoped, tag = 'scoped memory for tpu_custom_call.1']
    %14 = vsyncpa [#allocation3], 0
    %15 = vsyncpa [#allocation6], 0
    %16 = vsyncpa [#allocation4], 0
    %17 = vsyncpa [#allocation9], 0
    // Predicated region
    $region2: #{tpu_custom_call.1} parent=1 // pred_check
      _
    $region3: #{tpu_custom_call.1} parent=1 // pred_check_branch
      %19 = sbr.rel (0) target = $region5
    $region4: #{tpu_custom_call.1} parent=1 // pred_region
      _
    $region5: #{tpu_custom_call.1} parent=1 // pred_fallthru
      _
    // Predicated region
    $region6: #{tpu_custom_call.1} parent=1 // pred_check
      _
    $region7: #{tpu_custom_call.1} parent=1 // pred_check_branch
      %21 = sbr.rel (0) target = $region9
    $region8: #{tpu_custom_call.1} parent=1 // pred_region
      _
    $region9: #{tpu_custom_call.1} parent=1 // pred_fallthru
      _
    // Predicated region
    $region10: #{tpu_custom_call.1} parent=1 // pred_check
      _
    $region11: #{tpu_custom_call.1} parent=1 // pred_check_branch
      %23 = sbr.rel (0) target = $region13
    $region12: #{tpu_custom_call.1} parent=1 // pred_region
      _
    $region13: #{tpu_custom_call.1} parent=1 // pred_fallthru
      _
    // Predicated region
    $region14: #{tpu_custom_call.1} parent=1 // pred_check
      _
    $region15: #{tpu_custom_call.1} parent=1 // pred_check_branch
      %25 = sbr.rel (0) target = $region17
    $region16: #{tpu_custom_call.1} parent=1 // pred_region
      %s27 = ssub.s32 3584, 3584
      %28 = vsyncadd [#allocation3], %s27
      %s29 = sshll.u32 [#allocation2], 4
      %s30 = int_to_ptr.vmem [resolvable:$true] %s29
      %35 = dma.hbm_to_vmem [thread:$0]  %s3, 3584, %s30, [#allocation3], 512, 512, 32
    $region17: #{tpu_custom_call.1} parent=1 // pred_fallthru
      _
    // Predicated region
    $region18: #{tpu_custom_call.1} parent=1 // pred_check
      _
    $region19: #{tpu_custom_call.1} parent=1 // pred_check_branch
      %37 = sbr.rel (0) target = $region21
    $region20: #{tpu_custom_call.1} parent=1 // pred_region
      %s39 = ssub.s32 8192, 8192
      %40 = vsyncadd [#allocation6], %s39
      %s41 = sshll.u32 [#allocation5], 4
      %s42 = int_to_ptr.vmem [resolvable:$true] %s41
      %47 = dma.hbm_to_vmem [thread:$0]  %s4, 8192, %s42, [#allocation6], 64, 64, 4
    $region21: #{tpu_custom_call.1} parent=1 // pred_fallthru
      _
    // Predicated region
    $region22: #{tpu_custom_call.1} parent=1 // pred_check
      _
    $region23: #{tpu_custom_call.1} parent=1 // pred_check_branch
      %49 = sbr.rel (0) target = $region25
    $region24: #{tpu_custom_call.1} parent=1 // pred_region
      _
    $region25: #{tpu_custom_call.1} parent=1 // pred_fallthru
      _
    // Predicated region
    $region26: #{tpu_custom_call.1} parent=1 // pred_check
      _
    $region27: #{tpu_custom_call.1} parent=1 // pred_check_branch
      %51 = sbr.rel (0) target = $region29
    $region28: #{tpu_custom_call.1} parent=1 // pred_region
      _
    $region29: #{tpu_custom_call.1} parent=1 // pred_fallthru
      _
    // Predicated region
    $region30: #{tpu_custom_call.1} parent=1 // pred_check
      _
    $region31: #{tpu_custom_call.1} parent=1 // pred_check_branch
      %53 = sbr.rel (0) target = $region33
    $region32: #{tpu_custom_call.1} parent=1 // pred_region
      %54 = dma.done [#allocation3], 3584
    $region33: #{tpu_custom_call.1} parent=1 // pred_fallthru
      _
    // Predicated region
    $region34: #{tpu_custom_call.1} parent=1 // pred_check
      _
    $region35: #{tpu_custom_call.1} parent=1 // pred_check_branch
      %56 = sbr.rel (0) target = $region37
    $region36: #{tpu_custom_call.1} parent=1 // pred_region
      %57 = dma.done [#allocation6], 8192
    $region37: #{tpu_custom_call.1} parent=1 // pred_fallthru
      _
    %v59 = vld [vmem:[%s1] sm:$0x1]
    %v60 = vld [vmem:[%s1 + $0x1] sm:$0x1]
    %v61 = vld [vmem:[%s1 + $0x2] sm:$0x1]
    %v62 = vld [vmem:[%s1 + $0x3] sm:$0x1]
    %v63 = vld [vmem:[%s1 + $0x4] sm:$0x1]
    %v64 = vld [vmem:[%s1 + $0x5] sm:$0x1]
    %v65 = vld [vmem:[%s1 + $0x6] sm:$0x1]
    %v66 = vld [vmem:[%s0] sm:$0xf]
    %68 = vset.pattern.permute.xlu0 0
    %69 = vperm.xlu0 %68, %v66
    %v70 = vpop.permute.xlu0 %69
    %v72 = vlaneseq
    %v73 = vshrl.u32 %v72, 7
    %v74 = vsub.s32 0, %v73
    %v75 = vrot.slane %v59, %v74
    %v76 = vmul.f32 %v70, %v75
    %v77 = vlaneseq
    %v78 = vshrl.u32 %v77, 7
    %v79 = vsub.s32 0, %v78
    %v80 = vrot.slane %v60, %v79
    %v81 = vadd.f32 %v76, %v80
    %vm82 = vcmask 199680
    %v83 = vsel %vm82, %v81, 0.0
    %v84 = vrot.slane %v83, 4
    %v85 = vadd.f32 %v83, %v84
    %v86 = vrot.slane %v85, 2
    %v87 = vadd.f32 %v85, %v86
    %v88 = vrot.slane %v87, 1
    %v89 = vadd.f32 %v87, %v88
    %v90 = vrcp.pop 4.0
    %v91 = vmul.f32 %v89, %v90
    %v92 = vsub.f32 %v81, %v91
    %v93 = vmul.f32 %v92, %v92
    %v94 = vsel %vm82, %v93, 0.0
    %v95 = vrot.slane %v94, 4
    %v96 = vadd.f32 %v94, %v95
    %v97 = vrot.slane %v96, 2
    %v98 = vadd.f32 %v96, %v97
    %v99 = vrot.slane %v98, 1
    %v100 = vadd.f32 %v98, %v99
    %v101 = vmul.f32 %v100, %v90
    %v102 = vadd.f32 %v101, 1e-05
    %v103 = vrsqrt.pop %v102
    %v104 = vmul.f32 %v92, %v103
    %v105 = vlaneseq
    %v106 = vshrl.u32 %v105, 7
    %v107 = vsub.s32 0, %v106
    %v108 = vrot.slane %v61, %v107
    %v109 = vmul.f32 %v104, %v108
    %v110 = vlaneseq
    %v111 = vshrl.u32 %v110, 7
    %v112 = vsub.s32 0, %v111
    %v113 = vrot.slane %v62, %v112
    %v114 = vadd.f32 %v109, %v113
    %v115 = vmax.f32 %v114, 0.0
    %v117 = vrot.slane %v115, 1
    %vm119 = vcmask 1040384
    %v120 = vsel %vm119, %v115, %v117
    %v121 = vld [vmem:[%s2] sm:$0xff]
    %v122 = vld [vmem:[%s2 + $0x8] sm:$0xff]
    %v123 = vld [vmem:[%s2 + $0x10] sm:$0xff]
    %v124 = vld [vmem:[%s2 + $0x18] sm:$0x1]
    %v125 = vlaneseq
    %v126 = vshrl.u32 %v125, 7
    %v127 = vsub.s32 0, %v126
    %v128 = vrot.slane %v63, %v127
    %vm129 = vcmask 203776
    %v131 = vsel %vm129, %v120, 0
    %v134 = vsel %vm119, %v124, 0
    %136 = vmatprep.subr.mxu0 0.0
    %137 = vmatpush1.msra.mxu0 %v121
    %138 = vmatprep.subr.mxu0 0.0
    %139 = vmatpush1.msra.mxu0 %v122
    %140 = vmatprep.subr.mxu0 0.0
    %141 = vmatpush1.msra.mxu0 %v123
    %142 = vmatprep.subr.mxu0 0.0
    %143 = vmatpush1.msra.mxu0 %v134
    %144 = vmatprep.subr.mxu0 0.0
    %145 = vmatpush1.msra.mxu0 0.0
    %146 = vmatprep.subr.mxu0 0.0
    %147 = vmatpush1.msra.mxu0 0.0
    %148 = vmatprep.subr.mxu0 0.0
    %149 = vmatpush1.msra.mxu0 0.0
    %150 = vmatprep.subr.mxu0 0.0
    %151 = vmatpush1.msra.mxu0 0.0
    %152 = vmatprep.subr.mxu0 0.0
    %153 = vmatpush1.msra.mxu0 0.0
    %154 = vmatprep.subr.mxu0 0.0
    %155 = vmatpush1.msra.mxu0 0.0
    %156 = vmatprep.subr.mxu0 0.0
    %157 = vmatpush1.msra.mxu0 0.0
    %158 = vmatprep.subr.mxu0 0.0
    %159 = vmatpush1.msra.mxu0 0.0
    %160 = vmatprep.subr.mxu0 0.0
    %161 = vmatpush1.msra.mxu0 0.0
    %162 = vmatprep.subr.mxu0 0.0
    %163 = vmatpush1.msra.mxu0 0.0
    %164 = vmatprep.subr.mxu0 0.0
    %165 = vmatpush1.msra.mxu0 0.0
    %166 = vmatprep.subr.mxu0 0.0
    %167 = vmatpush1.msra.mxu0 0.0
    %168 = vmatprep.subr.mxu0 0.0
    %169 = vmatpush1.msra.mxu0 0.0
    %170 = vmatprep.subr.mxu0 0.0
    %171 = vmatpush1.msra.mxu0 0.0
    %172 = vmatprep.subr.mxu0 0.0
    %173 = vmatpush1.msra.mxu0 0.0
    %174 = vmatprep.subr.mxu0 0.0
    %175 = vmatpush1.msra.mxu0 0.0
    %176 = vmatprep.subr.mxu0 0.0
    %177 = vmatpush1.msra.mxu0 0.0
    %178 = vmatprep.subr.mxu0 0.0
    %179 = vmatpush1.msra.mxu0 0.0
    %180 = vmatprep.subr.mxu0 0.0
    %181 = vmatpush1.msra.mxu0 0.0
    %182 = vmatprep.subr.mxu0 0.0
    %183 = vmatpush1.msra.mxu0 0.0
    %184 = vmatprep.subr.mxu0 0.0
    %185 = vmatpush1.msra.mxu0 0.0
    %186 = vmatprep.subr.mxu0 0.0
    %187 = vmatpush1.msra.mxu0 0.0
    %188 = vmatprep.subr.mxu0 0.0
    %189 = vmatpush1.msra.mxu0 0.0
    %190 = vmatprep.subr.mxu0 0.0
    %191 = vmatpush1.msra.mxu0 0.0
    %192 = vmatprep.subr.mxu0 0.0
    %193 = vmatpush1.msra.mxu0 0.0
    %194 = vmatprep.subr.mxu0 0.0
    %195 = vmatpush1.msra.mxu0 0.0
    %196 = vmatprep.subr.mxu0 0.0
    %197 = vmatpush1.msra.mxu0 0.0
    %198 = vmatprep.subr.mxu0 0.0
    %199 = vmatpush1.msra.mxu0 0.0
    %200 = vmatprep.mubr.f32.mxu0 0.0
    %201 = vmatmul.mubr.f32.gmra.mrb[0].mxu0 %v131
    %v202 = vpop.f32.mrb[0].mxu0
    %v203 = vadd.f32 %v128, %v202
    %v204 = vpop.f32.mrb[0].mxu0
    %205 = vdwg.mxu0
    %vm206 = vcmask 402432
    %v207 = vsel %vm206, %v203, 0.0
    %v208 = vrot.slane %v207, 4
    %v209 = vadd.f32 %v207, %v208
    %v210 = vrot.slane %v209, 2
    %v211 = vadd.f32 %v209, %v210
    %v212 = vrot.slane %v211, 1
    %v213 = vadd.f32 %v211, %v212
    %v214 = vrcp.pop 2.0
    %v215 = vmul.f32 %v213, %v214
    %v216 = vsub.f32 %v203, %v215
    %v217 = vmul.f32 %v216, %v216
    %v218 = vsel %vm206, %v217, 0.0
    %v219 = vrot.slane %v218, 4
    %v220 = vadd.f32 %v218, %v219
    %v221 = vrot.slane %v220, 2
    %v222 = vadd.f32 %v220, %v221
    %v223 = vrot.slane %v222, 1
    %v224 = vadd.f32 %v222, %v223
    %v225 = vmul.f32 %v224, %v214
    %v226 = vadd.f32 %v225, 1e-05
    %v227 = vrsqrt.pop %v226
    %v228 = vmul.f32 %v216, %v227
    %v229 = vlaneseq
    %v230 = vshrl.u32 %v229, 7
    %v231 = vsub.s32 0, %v230
    %v232 = vrot.slane %v64, %v231
    %v233 = vmul.f32 %v228, %v232
    %v234 = vlaneseq
    %v235 = vshrl.u32 %v234, 7
    %v236 = vsub.s32 0, %v235
    %v237 = vrot.slane %v65, %v236
    %v238 = vadd.f32 %v233, %v237
    %v239 = vmax.f32 %v238, 0.0
    %vm240 = vcmask 401408
    %241 = vst.msk [vmem:[#allocation7] sm:$0x1] %vm240, %v239
    %v242 = vpack.c.bf16 %v239, %v239
    %v243 = vld [vmem:[#allocation2] sm:$0xff]
    %v244 = vld [vmem:[#allocation2 + $0x8] sm:$0xff]
    %v245 = vld [vmem:[#allocation2 + $0x10] sm:$0xff]
    %v246 = vld [vmem:[#allocation2 + $0x18] sm:$0xff]
    %v247 = vld [vmem:[#allocation2 + $0x20] sm:$0xff]
    %v248 = vld [vmem:[#allocation2 + $0x28] sm:$0xff]
    %v249 = vld [vmem:[#allocation2 + $0x30] sm:$0xff]
    %v250 = vld [vmem:[#allocation2 + $0x38] sm:$0xff]
    %v251 = vld [vmem:[#allocation2 + $0x40] sm:$0xff]
    %v252 = vld [vmem:[#allocation2 + $0x48] sm:$0xff]
    %v253 = vld [vmem:[#allocation2 + $0x50] sm:$0xff]
    %v254 = vld [vmem:[#allocation2 + $0x58] sm:$0xff]
    %v255 = vld [vmem:[#allocation2 + $0x60] sm:$0xff]
    %v256 = vld [vmem:[#allocation2 + $0x68] sm:$0xff]
    %v257 = vld [vmem:[#allocation2 + $0x70] sm:$0xff]
    %v258 = vld [vmem:[#allocation2 + $0x78] sm:$0xff]
    %v259 = vld [vmem:[#allocation2 + $0x80] sm:$0xff]
    %v260 = vld [vmem:[#allocation2 + $0x88] sm:$0xff]
    %v261 = vld [vmem:[#allocation2 + $0x90] sm:$0xff]
    %v262 = vld [vmem:[#allocation2 + $0x98] sm:$0xff]
    %v263 = vld [vmem:[#allocation2 + $0xa0] sm:$0xff]
    %v264 = vld [vmem:[#allocation2 + $0xa8] sm:$0xff]
    %v265 = vld [vmem:[#allocation2 + $0xb0] sm:$0xff]
    %v266 = vld [vmem:[#allocation2 + $0xb8] sm:$0xff]
    %v267 = vld [vmem:[#allocation2 + $0xc0] sm:$0x11]
    %v268 = vld [vmem:[#allocation2 + $0xc8] sm:$0x11]
    %v269 = vld [vmem:[#allocation2 + $0xd0] sm:$0x11]
    %v270 = vld [vmem:[#allocation2 + $0xd8] sm:$0x11]
    %v271 = vld [vmem:[%s6] sm:$0xff]
    %v300 = vunpack.c.l.b16 %v243
    %v301 = vunpack.c.h.b16 %v243
    %v302 = vunpack.c.l.b16 %v244
    %v303 = vunpack.c.h.b16 %v244
    %v304 = vunpack.c.l.b16 %v245
    %v305 = vunpack.c.h.b16 %v245
    %v306 = vunpack.c.l.b16 %v246
    %v307 = vunpack.c.h.b16 %v246
    %v308 = vunpack.c.l.b16 %v247
    %v309 = vunpack.c.h.b16 %v247
    %v310 = vunpack.c.l.b16 %v248
    %v311 = vunpack.c.h.b16 %v248
    %v312 = vunpack.c.l.b16 %v249
    %v313 = vunpack.c.h.b16 %v249
    %v314 = vunpack.c.l.b16 %v250
    %v315 = vunpack.c.h.b16 %v250
    %v316 = vunpack.c.l.b16 %v251
    %v317 = vunpack.c.h.b16 %v251
    %v318 = vunpack.c.l.b16 %v252
    %v319 = vunpack.c.h.b16 %v252
    %v320 = vunpack.c.l.b16 %v253
    %v321 = vunpack.c.h.b16 %v253
    %v322 = vunpack.c.l.b16 %v254
    %v323 = vunpack.c.h.b16 %v254
    %v324 = vunpack.c.l.b16 %v255
    %v325 = vunpack.c.h.b16 %v255
    %v326 = vunpack.c.l.b16 %v256
    %v327 = vunpack.c.h.b16 %v256
    %v328 = vunpack.c.l.b16 %v257
    %v329 = vunpack.c.h.b16 %v257
    %v330 = vunpack.c.l.b16 %v258
    %v331 = vunpack.c.h.b16 %v258
    %v332 = vunpack.c.l.b16 %v259
    %v333 = vunpack.c.h.b16 %v259
    %v334 = vunpack.c.l.b16 %v260
    %v335 = vunpack.c.h.b16 %v260
    %v336 = vunpack.c.l.b16 %v261
    %v337 = vunpack.c.h.b16 %v261
    %v338 = vunpack.c.l.b16 %v262
    %v339 = vunpack.c.h.b16 %v262
    %v340 = vunpack.c.l.b16 %v263
    %v341 = vunpack.c.h.b16 %v263
    %v342 = vunpack.c.l.b16 %v264
    %v343 = vunpack.c.h.b16 %v264
    %v344 = vunpack.c.l.b16 %v265
    %v345 = vunpack.c.h.b16 %v265
    %v346 = vunpack.c.l.b16 %v266
    %v347 = vunpack.c.h.b16 %v266
    %v348 = vunpack.c.l.b16 %v267
    %v349 = vunpack.c.h.b16 %v267
    %v350 = vunpack.c.l.b16 %v268
    %v351 = vunpack.c.h.b16 %v268
    %v352 = vunpack.c.l.b16 %v269
    %v353 = vunpack.c.h.b16 %v269
    %v354 = vunpack.c.l.b16 %v270
    %v355 = vunpack.c.h.b16 %v270
    %v356 = vpack.c.b16 %v308, %v300
    %v357 = vpack.c.b16 %v309, %v301
    %v358 = vpack.c.b16 %v310, %v302
    %v359 = vpack.c.b16 %v311, %v303
    %v360 = vpack.c.b16 %v312, %v304
    %v361 = vpack.c.b16 %v313, %v305
    %v362 = vpack.c.b16 %v314, %v306
    %v363 = vpack.c.b16 %v315, %v307
    %v364 = vpack.c.b16 %v324, %v316
    %v365 = vpack.c.b16 %v325, %v317
    %v366 = vpack.c.b16 %v326, %v318
    %v367 = vpack.c.b16 %v327, %v319
    %v368 = vpack.c.b16 %v328, %v320
    %v369 = vpack.c.b16 %v329, %v321
    %v370 = vpack.c.b16 %v330, %v322
    %v371 = vpack.c.b16 %v331, %v323
    %v372 = vpack.c.b16 %v340, %v332
    %v373 = vpack.c.b16 %v341, %v333
    %v374 = vpack.c.b16 %v342, %v334
    %v375 = vpack.c.b16 %v343, %v335
    %v376 = vpack.c.b16 %v344, %v336
    %v377 = vpack.c.b16 %v345, %v337
    %v378 = vpack.c.b16 %v346, %v338
    %v379 = vpack.c.b16 %v347, %v339
    %v380 = vpack.c.b16 %v348, %v348
    %v381 = vpack.c.b16 %v349, %v349
    %v382 = vpack.c.b16 %v350, %v350
    %v383 = vpack.c.b16 %v351, %v351
    %v384 = vpack.c.b16 %v352, %v352
    %v385 = vpack.c.b16 %v353, %v353
    %v386 = vpack.c.b16 %v354, %v354
    %v387 = vpack.c.b16 %v355, %v355
    %v413 = vlaneseq
    %v414 = vshrl.u32 %v413, 7
    %v415 = vsub.s32 0, %v414
    %v416 = vrot.slane %v271, %v415
    %v417 = vlaneseq
    %v418 = vshrl.u32 %v417, 7
    %v419 = vsub.s32 1, %v418
    %v420 = vrot.slane %v271, %v419
    %v421 = vlaneseq
    %v422 = vshrl.u32 %v421, 7
    %v423 = vsub.s32 2, %v422
    %v424 = vrot.slane %v271, %v423
    %v425 = vlaneseq
    %v426 = vshrl.u32 %v425, 7
    %v427 = vsub.s32 3, %v426
    %v428 = vrot.slane %v271, %v427
    %v429 = vlaneseq
    %v430 = vshrl.u32 %v429, 7
    %v431 = vsub.s32 4, %v430
    %v432 = vrot.slane %v271, %v431
    %v433 = vlaneseq
    %v434 = vshrl.u32 %v433, 7
    %v435 = vsub.s32 5, %v434
    %v436 = vrot.slane %v271, %v435
    %v437 = vlaneseq
    %v438 = vshrl.u32 %v437, 7
    %v439 = vsub.s32 6, %v438
    %v440 = vrot.slane %v271, %v439
    %v441 = vlaneseq
    %v442 = vshrl.u32 %v441, 7
    %v443 = vsub.s32 7, %v442
    %v444 = vrot.slane %v271, %v443
    %vm453 = vcmask 408576
    %v455 = vsel %vm453, %v242, 0
    %v458 = vsel %vm119, %v380, 0
    %v461 = vsel %vm119, %v381, 0
    %v464 = vsel %vm119, %v382, 0
    %v467 = vsel %vm119, %v383, 0
    %v470 = vsel %vm119, %v384, 0
    %v473 = vsel %vm119, %v385, 0
    %v476 = vsel %vm119, %v386, 0
    %v479 = vsel %vm119, %v387, 0
    %481 = vmatprep.subr.bf16.mxu0 %v357
    %482 = vmatpush1.bf16.msra.mxu0 %v356
    %483 = vmatprep.subr.bf16.mxu0 %v365
    %484 = vmatpush1.bf16.msra.mxu0 %v364
    %485 = vmatprep.subr.bf16.mxu0 %v373
    %486 = vmatpush1.bf16.msra.mxu0 %v372
    %487 = vmatprep.subr.bf16.mxu0 %v461
    %488 = vmatpush1.bf16.msra.mxu0 %v458
    %489 = vmatprep.subr.bf16.mxu0 0
    %490 = vmatpush1.bf16.msra.mxu0 0
    %491 = vmatprep.subr.bf16.mxu0 0
    %492 = vmatpush1.bf16.msra.mxu0 0
    %493 = vmatprep.subr.bf16.mxu0 0
    %494 = vmatpush1.bf16.msra.mxu0 0
    %495 = vmatprep.subr.bf16.mxu0 0
    %496 = vmatpush1.bf16.msra.mxu0 0
    %497 = vmatprep.subr.bf16.mxu0 0
    %498 = vmatpush1.bf16.msra.mxu0 0
    %499 = vmatprep.subr.bf16.mxu0 0
    %500 = vmatpush1.bf16.msra.mxu0 0
    %501 = vmatprep.subr.bf16.mxu0 0
    %502 = vmatpush1.bf16.msra.mxu0 0
    %503 = vmatprep.subr.bf16.mxu0 0
    %504 = vmatpush1.bf16.msra.mxu0 0
    %505 = vmatprep.subr.bf16.mxu0 0
    %506 = vmatpush1.bf16.msra.mxu0 0
    %507 = vmatprep.subr.bf16.mxu0 0
    %508 = vmatpush1.bf16.msra.mxu0 0
    %509 = vmatprep.subr.bf16.mxu0 0
    %510 = vmatpush1.bf16.msra.mxu0 0
    %511 = vmatprep.subr.bf16.mxu0 0
    %512 = vmatpush1.bf16.msra.mxu0 0
    %513 = vmatprep.mubr.bf16.mxu0 0
    %514 = vmatmul.mubr.bf16.gmra.mrb[0].mxu0 %v455
    %v515 = vpop.f32.mrb[0].mxu0
    %v516 = vadd.f32 %v416, %v515
    %v517 = vpop.f32.mrb[0].mxu0
    %v518 = vadd.f32 %v420, %v517
    %v519 = vpop.f32.mrb[0].mxu0
    %v520 = vpop.f32.mrb[0].mxu0
    %521 = vdwg.mxu0
    %522 = vmatprep.subr.bf16.mxu0 %v359
    %523 = vmatpush1.bf16.msra.mxu0 %v358
    %524 = vmatprep.subr.bf16.mxu0 %v367
    %525 = vmatpush1.bf16.msra.mxu0 %v366
    %526 = vmatprep.subr.bf16.mxu0 %v375
    %527 = vmatpush1.bf16.msra.mxu0 %v374
    %528 = vmatprep.subr.bf16.mxu0 %v467
    %529 = vmatpush1.bf16.msra.mxu0 %v464
    %530 = vmatprep.subr.bf16.mxu0 0
    %531 = vmatpush1.bf16.msra.mxu0 0
    %532 = vmatprep.subr.bf16.mxu0 0
    %533 = vmatpush1.bf16.msra.mxu0 0
    %534 = vmatprep.subr.bf16.mxu0 0
    %535 = vmatpush1.bf16.msra.mxu0 0
    %536 = vmatprep.subr.bf16.mxu0 0
    %537 = vmatpush1.bf16.msra.mxu0 0
    %538 = vmatprep.subr.bf16.mxu0 0
    %539 = vmatpush1.bf16.msra.mxu0 0
    %540 = vmatprep.subr.bf16.mxu0 0
    %541 = vmatpush1.bf16.msra.mxu0 0
    %542 = vmatprep.subr.bf16.mxu0 0
    %543 = vmatpush1.bf16.msra.mxu0 0
    %544 = vmatprep.subr.bf16.mxu0 0
    %545 = vmatpush1.bf16.msra.mxu0 0
    %546 = vmatprep.subr.bf16.mxu0 0
    %547 = vmatpush1.bf16.msra.mxu0 0
    %548 = vmatprep.subr.bf16.mxu0 0
    %549 = vmatpush1.bf16.msra.mxu0 0
    %550 = vmatprep.subr.bf16.mxu0 0
    %551 = vmatpush1.bf16.msra.mxu0 0
    %552 = vmatprep.subr.bf16.mxu0 0
    %553 = vmatpush1.bf16.msra.mxu0 0
    %554 = vmatprep.mubr.bf16.mxu0 0
    %555 = vmatmul.mubr.bf16.gmra.mrb[0].mxu0 %v455
    %v556 = vpop.f32.mrb[0].mxu0
    %v557 = vadd.f32 %v424, %v556
    %v558 = vpop.f32.mrb[0].mxu0
    %v559 = vadd.f32 %v428, %v558
    %v560 = vpop.f32.mrb[0].mxu0
    %v561 = vpop.f32.mrb[0].mxu0
    %562 = vdwg.mxu0
    %563 = vmatprep.subr.bf16.mxu0 %v361
    %564 = vmatpush1.bf16.msra.mxu0 %v360
    %565 = vmatprep.subr.bf16.mxu0 %v369
    %566 = vmatpush1.bf16.msra.mxu0 %v368
    %567 = vmatprep.subr.bf16.mxu0 %v377
    %568 = vmatpush1.bf16.msra.mxu0 %v376
    %569 = vmatprep.subr.bf16.mxu0 %v473
    %570 = vmatpush1.bf16.msra.mxu0 %v470
    %571 = vmatprep.subr.bf16.mxu0 0
    %572 = vmatpush1.bf16.msra.mxu0 0
    %573 = vmatprep.subr.bf16.mxu0 0
    %574 = vmatpush1.bf16.msra.mxu0 0
    %575 = vmatprep.subr.bf16.mxu0 0
    %576 = vmatpush1.bf16.msra.mxu0 0
    %577 = vmatprep.subr.bf16.mxu0 0
    %578 = vmatpush1.bf16.msra.mxu0 0
    %579 = vmatprep.subr.bf16.mxu0 0
    %580 = vmatpush1.bf16.msra.mxu0 0
    %581 = vmatprep.subr.bf16.mxu0 0
    %582 = vmatpush1.bf16.msra.mxu0 0
    %583 = vmatprep.subr.bf16.mxu0 0
    %584 = vmatpush1.bf16.msra.mxu0 0
    %585 = vmatprep.subr.bf16.mxu0 0
    %586 = vmatpush1.bf16.msra.mxu0 0
    %587 = vmatprep.subr.bf16.mxu0 0
    %588 = vmatpush1.bf16.msra.mxu0 0
    %589 = vmatprep.subr.bf16.mxu0 0
    %590 = vmatpush1.bf16.msra.mxu0 0
    %591 = vmatprep.subr.bf16.mxu0 0
    %592 = vmatpush1.bf16.msra.mxu0 0
    %593 = vmatprep.subr.bf16.mxu0 0
    %594 = vmatpush1.bf16.msra.mxu0 0
    %595 = vmatprep.mubr.bf16.mxu0 0
    %596 = vmatmul.mubr.bf16.gmra.mrb[0].mxu0 %v455
    %v597 = vpop.f32.mrb[0].mxu0
    %v598 = vadd.f32 %v432, %v597
    %v599 = vpop.f32.mrb[0].mxu0
    %v600 = vadd.f32 %v436, %v599
    %v601 = vpop.f32.mrb[0].mxu0
    %v602 = vpop.f32.mrb[0].mxu0
    %603 = vdwg.mxu0
    %604 = vmatprep.subr.bf16.mxu0 %v363
    %605 = vmatpush1.bf16.msra.mxu0 %v362
    %606 = vmatprep.subr.bf16.mxu0 %v371
    %607 = vmatpush1.bf16.msra.mxu0 %v370
    %608 = vmatprep.subr.bf16.mxu0 %v379
    %609 = vmatpush1.bf16.msra.mxu0 %v378
    %610 = vmatprep.subr.bf16.mxu0 %v479
    %611 = vmatpush1.bf16.msra.mxu0 %v476
    %612 = vmatprep.subr.bf16.mxu0 0
    %613 = vmatpush1.bf16.msra.mxu0 0
    %614 = vmatprep.subr.bf16.mxu0 0
    %615 = vmatpush1.bf16.msra.mxu0 0
    %616 = vmatprep.subr.bf16.mxu0 0
    %617 = vmatpush1.bf16.msra.mxu0 0
    %618 = vmatprep.subr.bf16.mxu0 0
    %619 = vmatpush1.bf16.msra.mxu0 0
    %620 = vmatprep.subr.bf16.mxu0 0
    %621 = vmatpush1.bf16.msra.mxu0 0
    %622 = vmatprep.subr.bf16.mxu0 0
    %623 = vmatpush1.bf16.msra.mxu0 0
    %624 = vmatprep.subr.bf16.mxu0 0
    %625 = vmatpush1.bf16.msra.mxu0 0
    %626 = vmatprep.subr.bf16.mxu0 0
    %627 = vmatpush1.bf16.msra.mxu0 0
    %628 = vmatprep.subr.bf16.mxu0 0
    %629 = vmatpush1.bf16.msra.mxu0 0
    %630 = vmatprep.subr.bf16.mxu0 0
    %631 = vmatpush1.bf16.msra.mxu0 0
    %632 = vmatprep.subr.bf16.mxu0 0
    %633 = vmatpush1.bf16.msra.mxu0 0
    %634 = vmatprep.subr.bf16.mxu0 0
    %635 = vmatpush1.bf16.msra.mxu0 0
    %636 = vmatprep.mubr.bf16.mxu0 0
    %637 = vmatmul.mubr.bf16.gmra.mrb[0].mxu0 %v455
    %v638 = vpop.f32.mrb[0].mxu0
    %v639 = vadd.f32 %v440, %v638
    %v640 = vpop.f32.mrb[0].mxu0
    %v641 = vadd.f32 %v444, %v640
    %v642 = vpop.f32.mrb[0].mxu0
    %v643 = vpop.f32.mrb[0].mxu0
    %644 = vdwg.mxu0
    %v645 = vmax.f32 %v516, 0.0
    %v646 = vmax.f32 %v518, 0.0
    %v647 = vmax.f32 %v557, 0.0
    %v648 = vmax.f32 %v559, 0.0
    %v649 = vmax.f32 %v598, 0.0
    %v650 = vmax.f32 %v600, 0.0
    %v651 = vmax.f32 %v639, 0.0
    %v652 = vmax.f32 %v641, 0.0
    %v653 = vpack.c.bf16 %v645, %v645
    %v654 = vpack.c.bf16 %v646, %v646
    %v655 = vpack.c.bf16 %v647, %v647
    %v656 = vpack.c.bf16 %v648, %v648
    %v657 = vpack.c.bf16 %v649, %v649
    %v658 = vpack.c.bf16 %v650, %v650
    %v659 = vpack.c.bf16 %v651, %v651
    %v660 = vpack.c.bf16 %v652, %v652
    %v661 = vld [vmem:[#allocation5] sm:$0xf]
    %v662 = vld [vmem:[#allocation5 + $0x4] sm:$0xf]
    %v663 = vld [vmem:[#allocation5 + $0x8] sm:$0xf]
    %v664 = vld [vmem:[#allocation5 + $0xc] sm:$0xf]
    %v665 = vld [vmem:[#allocation5 + $0x10] sm:$0xf]
    %v666 = vld [vmem:[#allocation5 + $0x14] sm:$0xf]
    %v667 = vld [vmem:[#allocation5 + $0x18] sm:$0xf]
    %v668 = vld [vmem:[#allocation5 + $0x1c] sm:$0xf]
    %v669 = vld [vmem:[#allocation5 + $0x20] sm:$0xf]
    %v670 = vld [vmem:[#allocation5 + $0x24] sm:$0xf]
    %v671 = vld [vmem:[#allocation5 + $0x28] sm:$0xf]
    %v672 = vld [vmem:[#allocation5 + $0x2c] sm:$0xf]
    %v673 = vld [vmem:[#allocation5 + $0x30] sm:$0xf]
    %v674 = vld [vmem:[#allocation5 + $0x34] sm:$0xf]
    %v675 = vld [vmem:[#allocation5 + $0x38] sm:$0xf]
    %v676 = vld [vmem:[#allocation5 + $0x3c] sm:$0xf]
    %v677 = vld [vmem:[#allocation5 + $0x40] sm:$0xf]
    %v678 = vld [vmem:[#allocation5 + $0x44] sm:$0xf]
    %v679 = vld [vmem:[#allocation5 + $0x48] sm:$0xf]
    %v680 = vld [vmem:[#allocation5 + $0x4c] sm:$0xf]
    %v681 = vld [vmem:[#allocation5 + $0x50] sm:$0xf]
    %v682 = vld [vmem:[#allocation5 + $0x54] sm:$0xf]
    %v683 = vld [vmem:[#allocation5 + $0x58] sm:$0xf]
    %v684 = vld [vmem:[#allocation5 + $0x5c] sm:$0xf]
    %v685 = vld [vmem:[#allocation5 + $0x60] sm:$0xf]
    %v686 = vld [vmem:[#allocation5 + $0x64] sm:$0xf]
    %v687 = vld [vmem:[#allocation5 + $0x68] sm:$0xf]
    %v688 = vld [vmem:[#allocation5 + $0x6c] sm:$0xf]
    %v689 = vld [vmem:[#allocation5 + $0x70] sm:$0xf]
    %v690 = vld [vmem:[#allocation5 + $0x74] sm:$0xf]
    %v691 = vld [vmem:[#allocation5 + $0x78] sm:$0xf]
    %v692 = vld [vmem:[#allocation5 + $0x7c] sm:$0xf]
    %v693 = vld [vmem:[#allocation5 + $0x80] sm:$0xf]
    %v694 = vld [vmem:[#allocation5 + $0x84] sm:$0xf]
    %v695 = vld [vmem:[#allocation5 + $0x88] sm:$0xf]
    %v696 = vld [vmem:[#allocation5 + $0x8c] sm:$0xf]
    %v697 = vld [vmem:[#allocation5 + $0x90] sm:$0xf]
    %v698 = vld [vmem:[#allocation5 + $0x94] sm:$0xf]
    %v699 = vld [vmem:[#allocation5 + $0x98] sm:$0xf]
    %v700 = vld [vmem:[#allocation5 + $0x9c] sm:$0xf]
    %v701 = vld [vmem:[#allocation5 + $0xa0] sm:$0xf]
    %v702 = vld [vmem:[#allocation5 + $0xa4] sm:$0xf]
    %v703 = vld [vmem:[#allocation5 + $0xa8] sm:$0xf]
    %v704 = vld [vmem:[#allocation5 + $0xac] sm:$0xf]
    %v705 = vld [vmem:[#allocation5 + $0xb0] sm:$0xf]
    %v706 = vld [vmem:[#allocation5 + $0xb4] sm:$0xf]
    %v707 = vld [vmem:[#allocation5 + $0xb8] sm:$0xf]
    %v708 = vld [vmem:[#allocation5 + $0xbc] sm:$0xf]
    %v709 = vld [vmem:[#allocation5 + $0xc0] sm:$0xf]
    %v710 = vld [vmem:[#allocation5 + $0xc4] sm:$0xf]
    %v711 = vld [vmem:[#allocation5 + $0xc8] sm:$0xf]
    %v712 = vld [vmem:[#allocation5 + $0xcc] sm:$0xf]
    %v713 = vld [vmem:[#allocation5 + $0xd0] sm:$0xf]
    %v714 = vld [vmem:[#allocation5 + $0xd4] sm:$0xf]
    %v715 = vld [vmem:[#allocation5 + $0xd8] sm:$0xf]
    %v716 = vld [vmem:[#allocation5 + $0xdc] sm:$0xf]
    %v717 = vld [vmem:[#allocation5 + $0xe0] sm:$0xf]
    %v718 = vld [vmem:[#allocation5 + $0xe4] sm:$0xf]
    %v719 = vld [vmem:[#allocation5 + $0xe8] sm:$0xf]
    %v720 = vld [vmem:[#allocation5 + $0xec] sm:$0xf]
    %v721 = vld [vmem:[#allocation5 + $0xf0] sm:$0xf]
    %v722 = vld [vmem:[#allocation5 + $0xf4] sm:$0xf]
    %v723 = vld [vmem:[#allocation5 + $0xf8] sm:$0xf]
    %v724 = vld [vmem:[#allocation5 + $0xfc] sm:$0xf]
    %v725 = vld [vmem:[#allocation5 + $0x100] sm:$0xf]
    %v726 = vld [vmem:[#allocation5 + $0x104] sm:$0xf]
    %v727 = vld [vmem:[#allocation5 + $0x108] sm:$0xf]
    %v728 = vld [vmem:[#allocation5 + $0x10c] sm:$0xf]
    %v729 = vld [vmem:[#allocation5 + $0x110] sm:$0xf]
    %v730 = vld [vmem:[#allocation5 + $0x114] sm:$0xf]
    %v731 = vld [vmem:[#allocation5 + $0x118] sm:$0xf]
    %v732 = vld [vmem:[#allocation5 + $0x11c] sm:$0xf]
    %v733 = vld [vmem:[#allocation5 + $0x120] sm:$0xf]
    %v734 = vld [vmem:[#allocation5 + $0x124] sm:$0xf]
    %v735 = vld [vmem:[#allocation5 + $0x128] sm:$0xf]
    %v736 = vld [vmem:[#allocation5 + $0x12c] sm:$0xf]
    %v737 = vld [vmem:[#allocation5 + $0x130] sm:$0xf]
    %v738 = vld [vmem:[#allocation5 + $0x134] sm:$0xf]
    %v739 = vld [vmem:[#allocation5 + $0x138] sm:$0xf]
    %v740 = vld [vmem:[#allocation5 + $0x13c] sm:$0xf]
    %v741 = vld [vmem:[#allocation5 + $0x140] sm:$0xf]
    %v742 = vld [vmem:[#allocation5 + $0x144] sm:$0xf]
    %v743 = vld [vmem:[#allocation5 + $0x148] sm:$0xf]
    %v744 = vld [vmem:[#allocation5 + $0x14c] sm:$0xf]
    %v745 = vld [vmem:[#allocation5 + $0x150] sm:$0xf]
    %v746 = vld [vmem:[#allocation5 + $0x154] sm:$0xf]
    %v747 = vld [vmem:[#allocation5 + $0x158] sm:$0xf]
    %v748 = vld [vmem:[#allocation5 + $0x15c] sm:$0xf]
    %v749 = vld [vmem:[#allocation5 + $0x160] sm:$0xf]
    %v750 = vld [vmem:[#allocation5 + $0x164] sm:$0xf]
    %v751 = vld [vmem:[#allocation5 + $0x168] sm:$0xf]
    %v752 = vld [vmem:[#allocation5 + $0x16c] sm:$0xf]
    %v753 = vld [vmem:[#allocation5 + $0x170] sm:$0xf]
    %v754 = vld [vmem:[#allocation5 + $0x174] sm:$0xf]
    %v755 = vld [vmem:[#allocation5 + $0x178] sm:$0xf]
    %v756 = vld [vmem:[#allocation5 + $0x17c] sm:$0xf]
    %v757 = vld [vmem:[#allocation5 + $0x180] sm:$0xf]
    %v758 = vld [vmem:[#allocation5 + $0x184] sm:$0xf]
    %v759 = vld [vmem:[#allocation5 + $0x188] sm:$0xf]
    %v760 = vld [vmem:[#allocation5 + $0x18c] sm:$0xf]
    %v761 = vld [vmem:[#allocation5 + $0x190] sm:$0xf]
    %v762 = vld [vmem:[#allocation5 + $0x194] sm:$0xf]
    %v763 = vld [vmem:[#allocation5 + $0x198] sm:$0xf]
    %v764 = vld [vmem:[#allocation5 + $0x19c] sm:$0xf]
    %v765 = vld [vmem:[#allocation5 + $0x1a0] sm:$0xf]
    %v766 = vld [vmem:[#allocation5 + $0x1a4] sm:$0xf]
    %v767 = vld [vmem:[#allocation5 + $0x1a8] sm:$0xf]
    %v768 = vld [vmem:[#allocation5 + $0x1ac] sm:$0xf]
    %v769 = vld [vmem:[#allocation5 + $0x1b0] sm:$0xf]
    %v770 = vld [vmem:[#allocation5 + $0x1b4] sm:$0xf]
    %v771 = vld [vmem:[#allocation5 + $0x1b8] sm:$0xf]
    %v772 = vld [vmem:[#allocation5 + $0x1bc] sm:$0xf]
    %v773 = vld [vmem:[#allocation5 + $0x1c0] sm:$0xf]
    %v774 = vld [vmem:[#allocation5 + $0x1c4] sm:$0xf]
    %v775 = vld [vmem:[#allocation5 + $0x1c8] sm:$0xf]
    %v776 = vld [vmem:[#allocation5 + $0x1cc] sm:$0xf]
    %v777 = vld [vmem:[#allocation5 + $0x1d0] sm:$0xf]
    %v778 = vld [vmem:[#allocation5 + $0x1d4] sm:$0xf]
    %v779 = vld [vmem:[#allocation5 + $0x1d8] sm:$0xf]
    %v780 = vld [vmem:[#allocation5 + $0x1dc] sm:$0xf]
    %v781 = vld [vmem:[#allocation5 + $0x1e0] sm:$0xf]
    %v782 = vld [vmem:[#allocation5 + $0x1e4] sm:$0xf]
    %v783 = vld [vmem:[#allocation5 + $0x1e8] sm:$0xf]
    %v784 = vld [vmem:[#allocation5 + $0x1ec] sm:$0xf]
    %v785 = vld [vmem:[#allocation5 + $0x1f0] sm:$0xf]
    %v786 = vld [vmem:[#allocation5 + $0x1f4] sm:$0xf]
    %v787 = vld [vmem:[#allocation5 + $0x1f8] sm:$0xf]
    %v788 = vld [vmem:[#allocation5 + $0x1fc] sm:$0xf]
    %v789 = vld [vmem:[%s6 + $0x8] sm:$0x1]
    %v918 = vunpack.c.l.b16 %v661
    %v919 = vunpack.c.l.b16 %v662
    %v920 = vunpack.c.l.b16 %v663
    %v921 = vunpack.c.l.b16 %v664
    %v922 = vunpack.c.l.b16 %v665
    %v923 = vunpack.c.l.b16 %v666
    %v924 = vunpack.c.l.b16 %v667
    %v925 = vunpack.c.l.b16 %v668
    %v926 = vunpack.c.l.b16 %v669
    %v927 = vunpack.c.l.b16 %v670
    %v928 = vunpack.c.l.b16 %v671
    %v929 = vunpack.c.l.b16 %v672
    %v930 = vunpack.c.l.b16 %v673
    %v931 = vunpack.c.l.b16 %v674
    %v932 = vunpack.c.l.b16 %v675
    %v933 = vunpack.c.l.b16 %v676
    %v934 = vunpack.c.l.b16 %v677
    %v935 = vunpack.c.l.b16 %v678
    %v936 = vunpack.c.l.b16 %v679
    %v937 = vunpack.c.l.b16 %v680
    %v938 = vunpack.c.l.b16 %v681
    %v939 = vunpack.c.l.b16 %v682
    %v940 = vunpack.c.l.b16 %v683
    %v941 = vunpack.c.l.b16 %v684
    %v942 = vunpack.c.l.b16 %v685
    %v943 = vunpack.c.l.b16 %v686
    %v944 = vunpack.c.l.b16 %v687
    %v945 = vunpack.c.l.b16 %v688
    %v946 = vunpack.c.l.b16 %v689
    %v947 = vunpack.c.l.b16 %v690
    %v948 = vunpack.c.l.b16 %v691
    %v949 = vunpack.c.l.b16 %v692
    %v950 = vunpack.c.l.b16 %v693
    %v951 = vunpack.c.l.b16 %v694
    %v952 = vunpack.c.l.b16 %v695
    %v953 = vunpack.c.l.b16 %v696
    %v954 = vunpack.c.l.b16 %v697
    %v955 = vunpack.c.l.b16 %v698
    %v956 = vunpack.c.l.b16 %v699
    %v957 = vunpack.c.l.b16 %v700
    %v958 = vunpack.c.l.b16 %v701
    %v959 = vunpack.c.l.b16 %v702
    %v960 = vunpack.c.l.b16 %v703
    %v961 = vunpack.c.l.b16 %v704
    %v962 = vunpack.c.l.b16 %v705
    %v963 = vunpack.c.l.b16 %v706
    %v964 = vunpack.c.l.b16 %v707
    %v965 = vunpack.c.l.b16 %v708
    %v966 = vunpack.c.l.b16 %v709
    %v967 = vunpack.c.l.b16 %v710
    %v968 = vunpack.c.l.b16 %v711
    %v969 = vunpack.c.l.b16 %v712
    %v970 = vunpack.c.l.b16 %v713
    %v971 = vunpack.c.l.b16 %v714
    %v972 = vunpack.c.l.b16 %v715
    %v973 = vunpack.c.l.b16 %v716
    %v974 = vunpack.c.l.b16 %v717
    %v975 = vunpack.c.l.b16 %v718
    %v976 = vunpack.c.l.b16 %v719
    %v977 = vunpack.c.l.b16 %v720
    %v978 = vunpack.c.l.b16 %v721
    %v979 = vunpack.c.l.b16 %v722
    %v980 = vunpack.c.l.b16 %v723
    %v981 = vunpack.c.l.b16 %v724
    %v982 = vunpack.c.l.b16 %v725
    %v983 = vunpack.c.l.b16 %v726
    %v984 = vunpack.c.l.b16 %v727
    %v985 = vunpack.c.l.b16 %v728
    %v986 = vunpack.c.l.b16 %v729
    %v987 = vunpack.c.l.b16 %v730
    %v988 = vunpack.c.l.b16 %v731
    %v989 = vunpack.c.l.b16 %v732
    %v990 = vunpack.c.l.b16 %v733
    %v991 = vunpack.c.l.b16 %v734
    %v992 = vunpack.c.l.b16 %v735
    %v993 = vunpack.c.l.b16 %v736
    %v994 = vunpack.c.l.b16 %v737
    %v995 = vunpack.c.l.b16 %v738
    %v996 = vunpack.c.l.b16 %v739
    %v997 = vunpack.c.l.b16 %v740
    %v998 = vunpack.c.l.b16 %v741
    %v999 = vunpack.c.l.b16 %v742
    %v1000 = vunpack.c.l.b16 %v743
    %v1001 = vunpack.c.l.b16 %v744
    %v1002 = vunpack.c.l.b16 %v745
    %v1003 = vunpack.c.l.b16 %v746
    %v1004 = vunpack.c.l.b16 %v747
    %v1005 = vunpack.c.l.b16 %v748
    %v1006 = vunpack.c.l.b16 %v749
    %v1007 = vunpack.c.l.b16 %v750
    %v1008 = vunpack.c.l.b16 %v751
    %v1009 = vunpack.c.l.b16 %v752
    %v1010 = vunpack.c.l.b16 %v753
    %v1011 = vunpack.c.l.b16 %v754
    %v1012 = vunpack.c.l.b16 %v755
    %v1013 = vunpack.c.l.b16 %v756
    %v1014 = vunpack.c.l.b16 %v757
    %v1015 = vunpack.c.l.b16 %v758
    %v1016 = vunpack.c.l.b16 %v759
    %v1017 = vunpack.c.l.b16 %v760
    %v1018 = vunpack.c.l.b16 %v761
    %v1019 = vunpack.c.l.b16 %v762
    %v1020 = vunpack.c.l.b16 %v763
    %v1021 = vunpack.c.l.b16 %v764
    %v1022 = vunpack.c.l.b16 %v765
    %v1023 = vunpack.c.l.b16 %v766
    %v1024 = vunpack.c.l.b16 %v767
    %v1025 = vunpack.c.l.b16 %v768
    %v1026 = vunpack.c.l.b16 %v769
    %v1027 = vunpack.c.l.b16 %v770
    %v1028 = vunpack.c.l.b16 %v771
    %v1029 = vunpack.c.l.b16 %v772
    %v1030 = vunpack.c.l.b16 %v773
    %v1031 = vunpack.c.l.b16 %v774
    %v1032 = vunpack.c.l.b16 %v775
    %v1033 = vunpack.c.l.b16 %v776
    %v1034 = vunpack.c.l.b16 %v777
    %v1035 = vunpack.c.l.b16 %v778
    %v1036 = vunpack.c.l.b16 %v779
    %v1037 = vunpack.c.l.b16 %v780
    %v1038 = vunpack.c.l.b16 %v781
    %v1039 = vunpack.c.l.b16 %v782
    %v1040 = vunpack.c.l.b16 %v783
    %v1041 = vunpack.c.l.b16 %v784
    %v1042 = vunpack.c.l.b16 %v785
    %v1043 = vunpack.c.l.b16 %v786
    %v1044 = vunpack.c.l.b16 %v787
    %v1045 = vunpack.c.l.b16 %v788
    %v1046 = vpack.c.b16 %v919, %v918
    %v1047 = vpack.c.b16 %v921, %v920
    %v1048 = vpack.c.b16 %v923, %v922
    %v1049 = vpack.c.b16 %v925, %v924
    %v1050 = vpack.c.b16 %v927, %v926
    %v1051 = vpack.c.b16 %v929, %v928
    %v1052 = vpack.c.b16 %v931, %v930
    %v1053 = vpack.c.b16 %v933, %v932
    %v1054 = vpack.c.b16 %v935, %v934
    %v1055 = vpack.c.b16 %v937, %v936
    %v1056 = vpack.c.b16 %v939, %v938
    %v1057 = vpack.c.b16 %v941, %v940
    %v1058 = vpack.c.b16 %v943, %v942
    %v1059 = vpack.c.b16 %v945, %v944
    %v1060 = vpack.c.b16 %v947, %v946
    %v1061 = vpack.c.b16 %v949, %v948
    %v1062 = vpack.c.b16 %v951, %v950
    %v1063 = vpack.c.b16 %v953, %v952
    %v1064 = vpack.c.b16 %v955, %v954
    %v1065 = vpack.c.b16 %v957, %v956
    %v1066 = vpack.c.b16 %v959, %v958
    %v1067 = vpack.c.b16 %v961, %v960
    %v1068 = vpack.c.b16 %v963, %v962
    %v1069 = vpack.c.b16 %v965, %v964
    %v1070 = vpack.c.b16 %v967, %v966
    %v1071 = vpack.c.b16 %v969, %v968
    %v1072 = vpack.c.b16 %v971, %v970
    %v1073 = vpack.c.b16 %v973, %v972
    %v1074 = vpack.c.b16 %v975, %v974
    %v1075 = vpack.c.b16 %v977, %v976
    %v1076 = vpack.c.b16 %v979, %v978
    %v1077 = vpack.c.b16 %v981, %v980
    %v1078 = vpack.c.b16 %v983, %v982
    %v1079 = vpack.c.b16 %v985, %v984
    %v1080 = vpack.c.b16 %v987, %v986
    %v1081 = vpack.c.b16 %v989, %v988
    %v1082 = vpack.c.b16 %v991, %v990
    %v1083 = vpack.c.b16 %v993, %v992
    %v1084 = vpack.c.b16 %v995, %v994
    %v1085 = vpack.c.b16 %v997, %v996
    %v1086 = vpack.c.b16 %v999, %v998
    %v1087 = vpack.c.b16 %v1001, %v1000
    %v1088 = vpack.c.b16 %v1003, %v1002
    %v1089 = vpack.c.b16 %v1005, %v1004
    %v1090 = vpack.c.b16 %v1007, %v1006
    %v1091 = vpack.c.b16 %v1009, %v1008
    %v1092 = vpack.c.b16 %v1011, %v1010
    %v1093 = vpack.c.b16 %v1013, %v1012
    %v1094 = vpack.c.b16 %v1015, %v1014
    %v1095 = vpack.c.b16 %v1017, %v1016
    %v1096 = vpack.c.b16 %v1019, %v1018
    %v1097 = vpack.c.b16 %v1021, %v1020
    %v1098 = vpack.c.b16 %v1023, %v1022
    %v1099 = vpack.c.b16 %v1025, %v1024
    %v1100 = vpack.c.b16 %v1027, %v1026
    %v1101 = vpack.c.b16 %v1029, %v1028
    %v1102 = vpack.c.b16 %v1031, %v1030
    %v1103 = vpack.c.b16 %v1033, %v1032
    %v1104 = vpack.c.b16 %v1035, %v1034
    %v1105 = vpack.c.b16 %v1037, %v1036
    %v1106 = vpack.c.b16 %v1039, %v1038
    %v1107 = vpack.c.b16 %v1041, %v1040
    %v1108 = vpack.c.b16 %v1043, %v1042
    %v1109 = vpack.c.b16 %v1045, %v1044
    %1174 = vmatprep.subr.bf16.mxu0 0
    %1175 = vmatpush1.bf16.msra.mxu0 %v1046
    %1176 = vmatprep.subr.bf16.mxu0 0
    %1177 = vmatpush1.bf16.msra.mxu0 %v1047
    %1178 = vmatprep.subr.bf16.mxu0 0
    %1179 = vmatpush1.bf16.msra.mxu0 %v1048
    %1180 = vmatprep.subr.bf16.mxu0 0
    %1181 = vmatpush1.bf16.msra.mxu0 %v1049
    %1182 = vmatprep.subr.bf16.mxu0 0
    %1183 = vmatpush1.bf16.msra.mxu0 %v1050
    %1184 = vmatprep.subr.bf16.mxu0 0
    %1185 = vmatpush1.bf16.msra.mxu0 %v1051
    %1186 = vmatprep.subr.bf16.mxu0 0
    %1187 = vmatpush1.bf16.msra.mxu0 %v1052
    %1188 = vmatprep.subr.bf16.mxu0 0
    %1189 = vmatpush1.bf16.msra.mxu0 %v1053
    %1190 = vmatprep.subr.bf16.mxu0 0
    %1191 = vmatpush1.bf16.msra.mxu0 %v1054
    %1192 = vmatprep.subr.bf16.mxu0 0
    %1193 = vmatpush1.bf16.msra.mxu0 %v1055
    %1194 = vmatprep.subr.bf16.mxu0 0
    %1195 = vmatpush1.bf16.msra.mxu0 %v1056
    %1196 = vmatprep.subr.bf16.mxu0 0
    %1197 = vmatpush1.bf16.msra.mxu0 %v1057
    %1198 = vmatprep.subr.bf16.mxu0 0
    %1199 = vmatpush1.bf16.msra.mxu0 %v1058
    %1200 = vmatprep.subr.bf16.mxu0 0
    %1201 = vmatpush1.bf16.msra.mxu0 %v1059
    %1202 = vmatprep.subr.bf16.mxu0 0
    %1203 = vmatpush1.bf16.msra.mxu0 %v1060
    %1204 = vmatprep.subr.bf16.mxu0 0
    %1205 = vmatpush1.bf16.msra.mxu0 %v1061
    %1206 = vmatprep.mubr.bf16.mxu0 %v654
    %1207 = vmatmul.mubr.bf16.gmra.mrb[0].mxu0 %v653
    %v1208 = vpop.f32.mrb[0].mxu0
    %v1209 = vadd.f32 %v789, %v1208
    %v1210 = vpop.f32.mrb[0].mxu0
    %v1211 = vpop.f32.mrb[0].mxu0
    %v1212 = vpop.f32.mrb[0].mxu0
    %1213 = vdwg.mxu0
    %1214 = vmatprep.subr.bf16.mxu0 0
    %1215 = vmatpush1.bf16.msra.mxu0 %v1062
    %1216 = vmatprep.subr.bf16.mxu0 0
    %1217 = vmatpush1.bf16.msra.mxu0 %v1063
    %1218 = vmatprep.subr.bf16.mxu0 0
    %1219 = vmatpush1.bf16.msra.mxu0 %v1064
    %1220 = vmatprep.subr.bf16.mxu0 0
    %1221 = vmatpush1.bf16.msra.mxu0 %v1065
    %1222 = vmatprep.subr.bf16.mxu0 0
    %1223 = vmatpush1.bf16.msra.mxu0 %v1066
    %1224 = vmatprep.subr.bf16.mxu0 0
    %1225 = vmatpush1.bf16.msra.mxu0 %v1067
    %1226 = vmatprep.subr.bf16.mxu0 0
    %1227 = vmatpush1.bf16.msra.mxu0 %v1068
    %1228 = vmatprep.subr.bf16.mxu0 0
    %1229 = vmatpush1.bf16.msra.mxu0 %v1069
    %1230 = vmatprep.subr.bf16.mxu0 0
    %1231 = vmatpush1.bf16.msra.mxu0 %v1070
    %1232 = vmatprep.subr.bf16.mxu0 0
    %1233 = vmatpush1.bf16.msra.mxu0 %v1071
    %1234 = vmatprep.subr.bf16.mxu0 0
    %1235 = vmatpush1.bf16.msra.mxu0 %v1072
    %1236 = vmatprep.subr.bf16.mxu0 0
    %1237 = vmatpush1.bf16.msra.mxu0 %v1073
    %1238 = vmatprep.subr.bf16.mxu0 0
    %1239 = vmatpush1.bf16.msra.mxu0 %v1074
    %1240 = vmatprep.subr.bf16.mxu0 0
    %1241 = vmatpush1.bf16.msra.mxu0 %v1075
    %1242 = vmatprep.subr.bf16.mxu0 0
    %1243 = vmatpush1.bf16.msra.mxu0 %v1076
    %1244 = vmatprep.subr.bf16.mxu0 0
    %1245 = vmatpush1.bf16.msra.mxu0 %v1077
    %1246 = vmatprep.mubr.bf16.mxu0 %v656
    %1247 = vmatmul.mubr.bf16.gmra.mrb[0].mxu0 %v655
    %v1248 = vpop.f32.mrb[0].mxu0
    %v1249 = vadd.f32 %v1209, %v1248
    %v1250 = vpop.f32.mrb[0].mxu0
    %v1251 = vpop.f32.mrb[0].mxu0
    %v1252 = vpop.f32.mrb[0].mxu0
    %1253 = vdwg.mxu0
    %1254 = vmatprep.subr.bf16.mxu0 0
    %1255 = vmatpush1.bf16.msra.mxu0 %v1078
    %1256 = vmatprep.subr.bf16.mxu0 0
    %1257 = vmatpush1.bf16.msra.mxu0 %v1079
    %1258 = vmatprep.subr.bf16.mxu0 0
    %1259 = vmatpush1.bf16.msra.mxu0 %v1080
    %1260 = vmatprep.subr.bf16.mxu0 0
    %1261 = vmatpush1.bf16.msra.mxu0 %v1081
    %1262 = vmatprep.subr.bf16.mxu0 0
    %1263 = vmatpush1.bf16.msra.mxu0 %v1082
    %1264 = vmatprep.subr.bf16.mxu0 0
    %1265 = vmatpush1.bf16.msra.mxu0 %v1083
    %1266 = vmatprep.subr.bf16.mxu0 0
    %1267 = vmatpush1.bf16.msra.mxu0 %v1084
    %1268 = vmatprep.subr.bf16.mxu0 0
    %1269 = vmatpush1.bf16.msra.mxu0 %v1085
    %1270 = vmatprep.subr.bf16.mxu0 0
    %1271 = vmatpush1.bf16.msra.mxu0 %v1086
    %1272 = vmatprep.subr.bf16.mxu0 0
    %1273 = vmatpush1.bf16.msra.mxu0 %v1087
    %1274 = vmatprep.subr.bf16.mxu0 0
    %1275 = vmatpush1.bf16.msra.mxu0 %v1088
    %1276 = vmatprep.subr.bf16.mxu0 0
    %1277 = vmatpush1.bf16.msra.mxu0 %v1089
    %1278 = vmatprep.subr.bf16.mxu0 0
    %1279 = vmatpush1.bf16.msra.mxu0 %v1090
    %1280 = vmatprep.subr.bf16.mxu0 0
    %1281 = vmatpush1.bf16.msra.mxu0 %v1091
    %1282 = vmatprep.subr.bf16.mxu0 0
    %1283 = vmatpush1.bf16.msra.mxu0 %v1092
    %1284 = vmatprep.subr.bf16.mxu0 0
    %1285 = vmatpush1.bf16.msra.mxu0 %v1093
    %1286 = vmatprep.mubr.bf16.mxu0 %v658
    %1287 = vmatmul.mubr.bf16.gmra.mrb[0].mxu0 %v657
    %v1288 = vpop.f32.mrb[0].mxu0
    %v1289 = vadd.f32 %v1249, %v1288
    %v1290 = vpop.f32.mrb[0].mxu0
    %v1291 = vpop.f32.mrb[0].mxu0
    %v1292 = vpop.f32.mrb[0].mxu0
    %1293 = vdwg.mxu0
    %1294 = vmatprep.subr.bf16.mxu0 0
    %1295 = vmatpush1.bf16.msra.mxu0 %v1094
    %1296 = vmatprep.subr.bf16.mxu0 0
    %1297 = vmatpush1.bf16.msra.mxu0 %v1095
    %1298 = vmatprep.subr.bf16.mxu0 0
    %1299 = vmatpush1.bf16.msra.mxu0 %v1096
    %1300 = vmatprep.subr.bf16.mxu0 0
    %1301 = vmatpush1.bf16.msra.mxu0 %v1097
    %1302 = vmatprep.subr.bf16.mxu0 0
    %1303 = vmatpush1.bf16.msra.mxu0 %v1098
    %1304 = vmatprep.subr.bf16.mxu0 0
    %1305 = vmatpush1.bf16.msra.mxu0 %v1099
    %1306 = vmatprep.subr.bf16.mxu0 0
    %1307 = vmatpush1.bf16.msra.mxu0 %v1100
    %1308 = vmatprep.subr.bf16.mxu0 0
    %1309 = vmatpush1.bf16.msra.mxu0 %v1101
    %1310 = vmatprep.subr.bf16.mxu0 0
    %1311 = vmatpush1.bf16.msra.mxu0 %v1102
    %1312 = vmatprep.subr.bf16.mxu0 0
    %1313 = vmatpush1.bf16.msra.mxu0 %v1103
    %1314 = vmatprep.subr.bf16.mxu0 0
    %1315 = vmatpush1.bf16.msra.mxu0 %v1104
    %1316 = vmatprep.subr.bf16.mxu0 0
    %1317 = vmatpush1.bf16.msra.mxu0 %v1105
    %1318 = vmatprep.subr.bf16.mxu0 0
    %1319 = vmatpush1.bf16.msra.mxu0 %v1106
    %1320 = vmatprep.subr.bf16.mxu0 0
    %1321 = vmatpush1.bf16.msra.mxu0 %v1107
    %1322 = vmatprep.subr.bf16.mxu0 0
    %1323 = vmatpush1.bf16.msra.mxu0 %v1108
    %1324 = vmatprep.subr.bf16.mxu0 0
    %1325 = vmatpush1.bf16.msra.mxu0 %v1109
    %1326 = vmatprep.mubr.bf16.mxu0 %v660
    %1327 = vmatmul.mubr.bf16.gmra.mrb[0].mxu0 %v659
    %v1328 = vpop.f32.mrb[0].mxu0
    %v1329 = vadd.f32 %v1289, %v1328
    %v1330 = vpop.f32.mrb[0].mxu0
    %v1331 = vpop.f32.mrb[0].mxu0
    %v1332 = vpop.f32.mrb[0].mxu0
    %1333 = vdwg.mxu0
    %v1334 = vmax.f32 %v1329, 0.0
    %v1335 = vld [vmem:[%s5] sm:$0xff]
    %v1336 = vld [vmem:[%s5 + $0x8] sm:$0xff]
    %v1337 = vld [vmem:[%s5 + $0x10] sm:$0xff]
    %v1338 = vld [vmem:[%s5 + $0x18] sm:$0xff]
    %v1339 = vld [vmem:[%s5 + $0x20] sm:$0xff]
    %v1340 = vld [vmem:[%s5 + $0x28] sm:$0xff]
    %v1341 = vld [vmem:[%s5 + $0x30] sm:$0xff]
    %v1342 = vld [vmem:[%s5 + $0x38] sm:$0xff]
    %v1343 = vld [vmem:[%s5 + $0x40] sm:$0xff]
    %v1344 = vld [vmem:[%s5 + $0x48] sm:$0xff]
    %v1345 = vld [vmem:[%s5 + $0x50] sm:$0xff]
    %v1346 = vld [vmem:[%s5 + $0x58] sm:$0xff]
    %v1347 = vld [vmem:[%s5 + $0x60] sm:$0xff]
    %v1348 = vld [vmem:[%s5 + $0x68] sm:$0xff]
    %v1349 = vld [vmem:[%s5 + $0x70] sm:$0xff]
    %v1350 = vld [vmem:[%s5 + $0x78] sm:$0xff]
    %v1351 = vld [vmem:[%s6 + $0x9] sm:$0x1]
    %1352 = vmatprep.subr.mxu0 0.0
    %1353 = vmatpush1.msra.mxu0 %v1335
    %1354 = vmatprep.subr.mxu0 0.0
    %1355 = vmatpush1.msra.mxu0 %v1336
    %1356 = vmatprep.subr.mxu0 0.0
    %1357 = vmatpush1.msra.mxu0 %v1337
    %1358 = vmatprep.subr.mxu0 0.0
    %1359 = vmatpush1.msra.mxu0 %v1338
    %1360 = vmatprep.subr.mxu0 0.0
    %1361 = vmatpush1.msra.mxu0 %v1339
    %1362 = vmatprep.subr.mxu0 0.0
    %1363 = vmatpush1.msra.mxu0 %v1340
    %1364 = vmatprep.subr.mxu0 0.0
    %1365 = vmatpush1.msra.mxu0 %v1341
    %1366 = vmatprep.subr.mxu0 0.0
    %1367 = vmatpush1.msra.mxu0 %v1342
    %1368 = vmatprep.subr.mxu0 0.0
    %1369 = vmatpush1.msra.mxu0 %v1343
    %1370 = vmatprep.subr.mxu0 0.0
    %1371 = vmatpush1.msra.mxu0 %v1344
    %1372 = vmatprep.subr.mxu0 0.0
    %1373 = vmatpush1.msra.mxu0 %v1345
    %1374 = vmatprep.subr.mxu0 0.0
    %1375 = vmatpush1.msra.mxu0 %v1346
    %1376 = vmatprep.subr.mxu0 0.0
    %1377 = vmatpush1.msra.mxu0 %v1347
    %1378 = vmatprep.subr.mxu0 0.0
    %1379 = vmatpush1.msra.mxu0 %v1348
    %1380 = vmatprep.subr.mxu0 0.0
    %1381 = vmatpush1.msra.mxu0 %v1349
    %1382 = vmatprep.subr.mxu0 0.0
    %1383 = vmatpush1.msra.mxu0 %v1350
    %1384 = vmatprep.subr.mxu0 0.0
    %1385 = vmatpush1.msra.mxu0 0.0
    %1386 = vmatprep.subr.mxu0 0.0
    %1387 = vmatpush1.msra.mxu0 0.0
    %1388 = vmatprep.subr.mxu0 0.0
    %1389 = vmatpush1.msra.mxu0 0.0
    %1390 = vmatprep.subr.mxu0 0.0
    %1391 = vmatpush1.msra.mxu0 0.0
    %1392 = vmatprep.subr.mxu0 0.0
    %1393 = vmatpush1.msra.mxu0 0.0
    %1394 = vmatprep.subr.mxu0 0.0
    %1395 = vmatpush1.msra.mxu0 0.0
    %1396 = vmatprep.subr.mxu0 0.0
    %1397 = vmatpush1.msra.mxu0 0.0
    %1398 = vmatprep.subr.mxu0 0.0
    %1399 = vmatpush1.msra.mxu0 0.0
    %1400 = vmatprep.subr.mxu0 0.0
    %1401 = vmatpush1.msra.mxu0 0.0
    %1402 = vmatprep.subr.mxu0 0.0
    %1403 = vmatpush1.msra.mxu0 0.0
    %1404 = vmatprep.subr.mxu0 0.0
    %1405 = vmatpush1.msra.mxu0 0.0
    %1406 = vmatprep.subr.mxu0 0.0
    %1407 = vmatpush1.msra.mxu0 0.0
    %1408 = vmatprep.subr.mxu0 0.0
    %1409 = vmatpush1.msra.mxu0 0.0
    %1410 = vmatprep.subr.mxu0 0.0
    %1411 = vmatpush1.msra.mxu0 0.0
    %1412 = vmatprep.subr.mxu0 0.0
    %1413 = vmatpush1.msra.mxu0 0.0
    %1414 = vmatprep.subr.mxu0 0.0
    %1415 = vmatpush1.msra.mxu0 0.0
    %1416 = vmatprep.mubr.f32.mxu0 0.0
    %1417 = vmatmul.mubr.f32.gmra.mrb[0].mxu0 %v1334
    %v1418 = vpop.f32.mrb[0].mxu0
    %v1419 = vadd.f32 %v1351, %v1418
    %v1420 = vpop.f32.mrb[0].mxu0
    %1421 = vdwg.mxu0
    %vm1422 = vcmask 40960
    %1423 = vst.msk [vmem:[#allocation8] sm:$0x1] %vm1422, %v1419
    // Predicated region
    $region38: #{tpu_custom_call.1} parent=1 // pred_check
      _
    $region39: #{tpu_custom_call.1} parent=1 // pred_check_branch
      %1425 = sbr.rel (0) target = $region41
    $region40: #{tpu_custom_call.1} parent=1 // pred_region
      %s1427 = ssub.s32 16, 16
      %1428 = vsyncadd [#allocation4], %s1427
      %s1430 = sshll.u32 [#allocation7], 4
      %s1431 = int_to_ptr.vmem [resolvable:$true] %s1430
      %1433 = dma.vmem_to_hbm [thread:$0]  %s1431, 16, %s7, [#allocation4]
    $region41: #{tpu_custom_call.1} parent=1 // pred_fallthru
      _
    // Predicated region
    $region42: #{tpu_custom_call.1} parent=1 // pred_check
      _
    $region43: #{tpu_custom_call.1} parent=1 // pred_check_branch
      %1435 = sbr.rel (0) target = $region45
    $region44: #{tpu_custom_call.1} parent=1 // pred_region
      %s1437 = ssub.s32 16, 16
      %1438 = vsyncadd [#allocation9], %s1437
      %s1440 = sshll.u32 [#allocation8], 4
      %s1441 = int_to_ptr.vmem [resolvable:$true] %s1440
      %1443 = dma.vmem_to_hbm [thread:$0]  %s1441, 16, %s8, [#allocation9]
    $region45: #{tpu_custom_call.1} parent=1 // pred_fallthru
      _
    // Predicated region
    $region46: #{tpu_custom_call.1} parent=1 // pred_check
      _
    $region47: #{tpu_custom_call.1} parent=1 // pred_check_branch
      %1445 = sbr.rel (0) target = $region49
    $region48: #{tpu_custom_call.1} parent=1 // pred_region
      %1446 = dma.done [#allocation4], 16
    $region49: #{tpu_custom_call.1} parent=1 // pred_fallthru
      _
    // Predicated region
    $region50: #{tpu_custom_call.1} parent=1 // pred_check
      _
    $region51: #{tpu_custom_call.1} parent=1 // pred_check_branch
      %1448 = sbr.rel (0) target = $region53
    $region52: #{tpu_custom_call.1} parent=1 // pred_region
      %1449 = dma.done [#allocation9], 16
    $region53: #{tpu_custom_call.1} parent=1 // pred_fallthru
      _
    %1450 = vsyncpa [#allocation3], 1
    %1451 = vsyncpa [#allocation6], 1
    %1452 = vsyncpa [#allocation4], 1
    %1453 = vsyncpa [#allocation9], 1

</llo_original>
